<compile_context>
chip_gen: v5e
topology: v5e:2x2
jax: 0.10.0
libtpu: 0.0.40
codegen_flags: <defaults>
</compile_context>

<pallas_src>
import functools

import jax
import jax.numpy as jnp
from jax import lax
from jax.experimental import pallas as pl
from jax.experimental.pallas import tpu as pltpu


def _sobel_grad_mag(x, ncol_first, ncol_last, gx_ref, gy_ref, H, W):
    """sqrt(gx^2 + gy^2 + 1e-6) of a 3x3 Sobel cross-correlation with zero padding.

    Separable form: horizontal pass via 2 lane rolls whose wrapped column is zeroed
    with tiny (1, W) multiplicative masks; vertical pass via wrapping sublane rolls,
    then only rows 0 and H-1 of the gx / gy VMEM scratch are rewritten with the
    zero-padded values (instead of full-array selects).
    """
    dt = x.dtype
    x_left = pltpu.roll(x, 1, 1) * ncol_first        # x[:, c-1], 0 at c == 0
    x_right = pltpu.roll(x, W - 1, 1) * ncol_last    # x[:, c+1], 0 at c == W-1
    hdiff = x_right - x_left                  # horizontal pass of sobel_x
    hsmooth = x_left + 2.0 * x + x_right      # horizontal pass of sobel_y

    # Vertical pass with wrapping rolls; rows 0 and H-1 picked up the wrapped row
    # and are overwritten with the correct (zero-padded) values.
    gx_ref[...] = (pltpu.roll(hdiff, 1, 0) + 2.0 * hdiff
                   + pltpu.roll(hdiff, H - 1, 0)).astype(dt)
    gx_ref[0:1, :] = (2.0 * hdiff[0:1, :] + hdiff[1:2, :]).astype(dt)
    gx_ref[H - 1:H, :] = (hdiff[H - 2:H - 1, :]
                          + 2.0 * hdiff[H - 1:H, :]).astype(dt)

    gy_ref[...] = (pltpu.roll(hsmooth, H - 1, 0)
                   - pltpu.roll(hsmooth, 1, 0)).astype(dt)
    gy_ref[0:1, :] = hsmooth[1:2, :].astype(dt)
    gy_ref[H - 1:H, :] = (-hsmooth[H - 2:H - 1, :]).astype(dt)

    gx = gx_ref[...]
    gy = gy_ref[...]
    return jnp.sqrt(gx * gx + gy * gy + 1e-6)


def _depth_loss_kernel(pred_ref, target_ref, out_ref, gx_ref, gy_ref, *,
                       H, W, assume_finite, grad_dtype):
    """Per-batch partial sums into lanes 0..3 of the (1, 1, 128) output block:
       [sum(log_diff^2), sum(log_diff), mask_count, sum(|pg - tg| * mask)]."""
    pred = pred_ref[0].astype(jnp.float32)      # (H, W)
    target = target_ref[0].astype(jnp.float32)  # (H, W)

    # mask = (target > 0) [& isfinite(target) & isfinite(pred)]
    mask = target > 0.0
    if not assume_finite:
        mask = mask & jnp.isfinite(target) & jnp.isfinite(pred)
    mask_f = mask.astype(jnp.float32)

    # --- Scale-invariant loss pieces.  Two logs keep the divide off the VALU (EUP
    # has slack).  Masked-out pixels yield exactly log(1+eps) - log(1+eps) == 0,
    # so no trailing mask multiply is needed. ---
    log_diff = (jnp.log(jnp.where(mask, pred, 1.0) + 1e-6)
                - jnp.log(jnp.where(mask, target, 1.0) + 1e-6))

    # --- Edge-aware gradient loss (Sobel on the *unmasked* inputs, like the reference).
    # Column-border masks are built from a tiny (1, W) iota and broadcast in the
    # multiplies; no full (H, W) iota/compare work per step. ---
    col = lax.broadcasted_iota(jnp.int32, (1, W), 1)
    ncol_first = (col > 0).astype(grad_dtype)
    ncol_last = (col < W - 1).astype(grad_dtype)

    pred_grad = _sobel_grad_mag(pred.astype(grad_dtype), ncol_first, ncol_last,
                                gx_ref, gy_ref, H, W)
    target_grad = _sobel_grad_mag(target.astype(grad_dtype), ncol_first, ncol_last,
                                  gx_ref, gy_ref, H, W)
    edge_sum = jnp.sum(jnp.abs(pred_grad - target_grad).astype(jnp.float32) * mask_f)

    sum_ld2 = jnp.sum(log_diff * log_diff)
    sum_ld = jnp.sum(log_diff)
    n_count = jnp.sum(mask_f)

    lane = lax.broadcasted_iota(jnp.int32, (1, 1, 128), 2)
    out_ref[...] = (jnp.where(lane == 0, sum_ld2, 0.0)
                    + jnp.where(lane == 1, sum_ld, 0.0)
                    + jnp.where(lane == 2, n_count, 0.0)
                    + jnp.where(lane == 3, edge_sum, 0.0))


def depth_estimation_loss(pred, target, si_weight=1.0, edge_weight=0.1, alpha=0.5,
                          assume_finite=False, grad_dtype=jnp.float32):
    """Matches DepthEstimationLoss.forward semantics; returns (total, si, edge).

    assume_finite: skip the isfinite() terms of the validity mask when the producer
      guarantees finite depth maps (invalid encoded as 0).
    grad_dtype: dtype for the Sobel-gradient branch; jnp.bfloat16 roughly halves its
      VALU cost on v6e / v7x (keep jnp.float32 on v5e or for tight tolerances).
    """
    B, H, W = pred.shape

    # Pad to sublane/lane multiples so every vreg is dense and the lane rolls stay
    # cheap.  Zero padding is semantically transparent: padded pixels have
    # target == 0 (masked out of every sum) and reproduce the 3x3 conv's zero
    # padding for the genuine border pixels.
    pad_h = (-H) % 8
    pad_w = (-W) % 128
    if pad_h or pad_w:
        pred = jnp.pad(pred, ((0, 0), (0, pad_h), (0, pad_w)))
        target = jnp.pad(target, ((0, 0), (0, pad_h), (0, pad_w)))
    Hp, Wp = H + pad_h, W + pad_w

    # TODO(synk): for very large images add a row-tiled grid axis with a 1-row halo
    # (manual make_async_copy of TILE_H+2 rows) and per-tile partial outputs so the
    # spatial axis can also be parallel; not needed at typical depth-map sizes.

    in_bytes = Hp * Wp * jnp.dtype(pred.dtype).itemsize
    grad_bytes = Hp * Wp * jnp.dtype(grad_dtype).itemsize
    # 2 inputs x 2 pipeline buffers + gx/gy scratch + ~10 f32 temporaries + headroom.
    est = 4 * in_bytes + 2 * grad_bytes + 10 * Hp * Wp * 4 + (2 << 20)
    vmem_limit = int(min(max(est, 32 << 20), 128 << 20))

    kernel = functools.partial(_depth_loss_kernel, H=Hp, W=Wp,
                               assume_finite=assume_finite, grad_dtype=grad_dtype)
    acc = pl.pallas_call(
        kernel,
        out_shape=jax.ShapeDtypeStruct((B, 1, 128), jnp.float32),
        grid_spec=pltpu.PrefetchScalarGridSpec(
            num_scalar_prefetch=0,
            grid=(B,),
            in_specs=[
                pl.BlockSpec((1, Hp, Wp), lambda b: (b, 0, 0)),
                pl.BlockSpec((1, Hp, Wp), lambda b: (b, 0, 0)),
            ],
            out_specs=pl.BlockSpec((1, 1, 128), lambda b: (b, 0, 0)),
            scratch_shapes=[
                pltpu.VMEM((Hp, Wp), grad_dtype),
                pltpu.VMEM((Hp, Wp), grad_dtype),
            ],
        ),
        compiler_params=pltpu.CompilerParams(
            dimension_semantics=("parallel",),
            vmem_limit_bytes=vmem_limit,
        ),
    )(pred, target)

    totals = jnp.sum(acc.reshape(B, 128), axis=0)
    sum_ld2, sum_ld, n, edge_num = totals[0], totals[1], totals[2], totals[3]

    n_safe = jnp.maximum(n, 1.0)
    term1 = sum_ld2 / n_safe
    term2 = alpha * (sum_ld / n_safe) ** 2
    si = term1 - term2
    edge = edge_num / (n + 1e-6)

    zero = jnp.float32(0.0)
    has_valid = n > 0.0
    si = jnp.where(has_valid, si, zero)
    edge = jnp.where(has_valid, edge, zero)
    total = jnp.where(has_valid, si_weight * si + edge_weight * edge, zero)
    return total, si, edge


def _reference(pred, target, si_weight=1.0, edge_weight=0.1, alpha=0.5):
    """Pure-JAX reference matching the PyTorch module (for a correctness check)."""
    pred = pred.astype(jnp.float32)
    target = target.astype(jnp.float32)
    mask = (target > 0) & jnp.isfinite(target) & jnp.isfinite(pred)
    mask_f = mask.astype(jnp.float32)
    n = mask_f.sum()

    log_diff = (jnp.log(jnp.where(mask, pred, 1.0) + 1e-6)
                - jnp.log(jnp.where(mask, target, 1.0) + 1e-6)) * mask_f
    si = (log_diff ** 2).sum() / n - alpha * (log_diff.sum() / n) ** 2

    kx = ((-1.0, 0.0, 1.0), (-2.0, 0.0, 2.0), (-1.0, 0.0, 1.0))
    ky = ((-1.0, -2.0, -1.0), (0.0, 0.0, 0.0), (1.0, 2.0, 1.0))

    def grad_mag(x):
        xp = jnp.pad(x, ((0, 0), (1, 1), (1, 1)))
        H, W = x.shape[1:]
        gx = jnp.zeros_like(x)
        gy = jnp.zeros_like(x)
        for a in range(3):
            for c in range(3):
                s = xp[:, a:a + H, c:c + W]
                gx = gx + kx[a][c] * s
                gy = gy + ky[a][c] * s
        return jnp.sqrt(gx * gx + gy * gy + 1e-6)

    pg = grad_mag(pred)
    tg = grad_mag(target)
    edge = (jnp.abs(pg - tg) * mask_f).sum() / (n + 1e-6)
    total = si_weight * si + edge_weight * edge
    return total, si, edge


if __name__ == "__main__":
    key = jax.random.PRNGKey(0)
    B, H, W = 2, 16, 128
    k1, k2 = jax.random.split(key)
    pred = jax.random.uniform(k1, (B, H, W), jnp.float32, minval=0.1, maxval=10.0)
    target = jax.random.uniform(k2, (B, H, W), jnp.float32, minval=0.1, maxval=10.0)
    # Introduce some invalid (non-positive) targets to exercise the mask path.
    target = target.at[:, :2, :8].set(0.0)

    total, si, edge = depth_estimation_loss(pred, target)
    total = jax.block_until_ready(total)

    ref_total, ref_si, ref_edge = _reference(pred, target)
    assert jnp.isfinite(total)
    assert jnp.allclose(total, ref_total, rtol=1e-3, atol=1e-3)
    assert jnp.allclose(si, ref_si, rtol=1e-3, atol=1e-3)
    assert jnp.allclose(edge, ref_edge, rtol=1e-3, atol=1e-3)

    loss_dict = {"si_loss": float(si), "edge_loss": float(edge)}
    print("KERNEL_OK")
</pallas_src>

<mosaic_0001>
module attributes {stable_mosaic.version = 11 : i64} {
  func.func @_depth_loss_kernel(%arg0: i32, %arg1: memref<1x16x128xf32, #tpu.memory_space<vmem>>, %arg2: memref<1x16x128xf32, #tpu.memory_space<vmem>>, %arg3: memref<1x1x128xf32, #tpu.memory_space<vmem>>, %arg4: memref<16x128xf32, #tpu.memory_space<vmem>>, %arg5: memref<16x128xf32, #tpu.memory_space<vmem>>) attributes {dimension_semantics = [#tpu.dimension_semantics<parallel>], iteration_bounds = array<i64: 2>, scalar_prefetch = 0 : i64, scratch_operands = 2 : i64, tpu.core_type = #tpu.core_type<tc>, window_params = [{transform_indices = @transform_0, window_bounds = array<i64: 1, 16, 128>}, {transform_indices = @transform_1, window_bounds = array<i64: 1, 16, 128>}, {transform_indices = @transform_2, window_bounds = array<i64: 1, 1, 128>}]} {
    %c0 = arith.constant 0 : index
    %c0_0 = arith.constant 0 : index
    %c0_1 = arith.constant 0 : index
    %0 = vector.load %arg1[%c0, %c0_0, %c0_1] : memref<1x16x128xf32, #tpu.memory_space<vmem>>, vector<1x16x128xf32>
    %1 = vector.shape_cast %0 : vector<1x16x128xf32> to vector<16x128xf32>
    %c0_2 = arith.constant 0 : index
    %c0_3 = arith.constant 0 : index
    %c0_4 = arith.constant 0 : index
    %2 = vector.load %arg2[%c0_2, %c0_3, %c0_4] : memref<1x16x128xf32, #tpu.memory_space<vmem>>, vector<1x16x128xf32>
    %3 = vector.shape_cast %2 : vector<1x16x128xf32> to vector<16x128xf32>
    %cst = arith.constant 0.000000e+00 : f32
    %4 = vector.broadcast %cst : f32 to vector<16x128xf32>
    %5 = arith.cmpf ogt, %3, %4 : vector<16x128xf32>
    %6 = tpu.weird %3 : vector<16x128xf32> -> vector<16x128xi1>
    %cst_5 = arith.constant dense<true> : vector<16x128xi1>
    %7 = arith.xori %6, %cst_5 : vector<16x128xi1>
    %8 = arith.andi %5, %7 : vector<16x128xi1>
    %9 = tpu.weird %1 : vector<16x128xf32> -> vector<16x128xi1>
    %cst_6 = arith.constant dense<true> : vector<16x128xi1>
    %10 = arith.xori %9, %cst_6 : vector<16x128xi1>
    %11 = arith.andi %8, %10 : vector<16x128xi1>
    %12 = arith.extui %11 : vector<16x128xi1> to vector<16x128xi32>
    %13 = arith.sitofp %12 : vector<16x128xi32> to vector<16x128xf32>
    %cst_7 = arith.constant 1.000000e+00 : f32
    %14 = vector.broadcast %cst_7 : f32 to vector<16x128xf32>
    %15 = arith.select %11, %1, %14 : vector<16x128xi1>, vector<16x128xf32>
    %cst_8 = arith.constant 9.99999997E-7 : f32
    %16 = vector.broadcast %cst_8 : f32 to vector<16x128xf32>
    %17 = arith.addf %15, %16 : vector<16x128xf32>
    %18 = math.log %17 : vector<16x128xf32>
    %cst_9 = arith.constant 1.000000e+00 : f32
    %19 = vector.broadcast %cst_9 : f32 to vector<16x128xf32>
    %20 = arith.select %11, %3, %19 : vector<16x128xi1>, vector<16x128xf32>
    %cst_10 = arith.constant 9.99999997E-7 : f32
    %21 = vector.broadcast %cst_10 : f32 to vector<16x128xf32>
    %22 = arith.addf %20, %21 : vector<16x128xf32>
    %23 = math.log %22 : vector<16x128xf32>
    %24 = arith.subf %18, %23 : vector<16x128xf32>
    %25 = tpu.iota {dimensions = array<i32: 1>} : vector<1x128xi32>
    %c0_i32 = arith.constant 0 : i32
    %26 = vector.broadcast %c0_i32 : i32 to vector<1x128xi32>
    %27 = arith.cmpi sgt, %25, %26 : vector<1x128xi32>
    %28 = arith.extui %27 : vector<1x128xi1> to vector<1x128xi32>
    %29 = arith.sitofp %28 : vector<1x128xi32> to vector<1x128xf32>
    %c127_i32 = arith.constant 127 : i32
    %30 = vector.broadcast %c127_i32 : i32 to vector<1x128xi32>
    %31 = arith.cmpi slt, %25, %30 : vector<1x128xi32>
    %32 = arith.extui %31 : vector<1x128xi1> to vector<1x128xi32>
    %33 = arith.sitofp %32 : vector<1x128xi32> to vector<1x128xf32>
    %c1_i32 = arith.constant 1 : i32
    %34 = tpu.dynamic_rotate %1 by %c1_i32 dim 1 : vector<16x128xf32>, i32 -> vector<16x128xf32>
    %35 = vector.broadcast %29 : vector<1x128xf32> to vector<16x128xf32>
    %36 = arith.mulf %34, %35 : vector<16x128xf32>
    %c127_i32_11 = arith.constant 127 : i32
    %37 = tpu.dynamic_rotate %1 by %c127_i32_11 dim 1 : vector<16x128xf32>, i32 -> vector<16x128xf32>
    %38 = vector.broadcast %33 : vector<1x128xf32> to vector<16x128xf32>
    %39 = arith.mulf %37, %38 : vector<16x128xf32>
    %40 = arith.subf %39, %36 : vector<16x128xf32>
    %cst_12 = arith.constant 2.000000e+00 : f32
    %41 = vector.broadcast %cst_12 : f32 to vector<16x128xf32>
    %42 = arith.mulf %41, %1 : vector<16x128xf32>
    %43 = arith.addf %36, %42 : vector<16x128xf32>
    %44 = arith.addf %43, %39 : vector<16x128xf32>
    %c1_i32_13 = arith.constant 1 : i32
    %45 = tpu.dynamic_rotate %40 by %c1_i32_13 dim 0 : vector<16x128xf32>, i32 -> vector<16x128xf32>
    %cst_14 = arith.constant 2.000000e+00 : f32
    %46 = vector.broadcast %cst_14 : f32 to vector<16x128xf32>
    %47 = arith.mulf %46, %40 : vector<16x128xf32>
    %48 = arith.addf %45, %47 : vector<16x128xf32>
    %c15_i32 = arith.constant 15 : i32
    %49 = tpu.dynamic_rotate %40 by %c15_i32 dim 0 : vector<16x128xf32>, i32 -> vector<16x128xf32>
    %50 = arith.addf %48, %49 : vector<16x128xf32>
    %c0_15 = arith.constant 0 : index
    %c0_16 = arith.constant 0 : index
    %51 = vector.load %arg4[%c0_15, %c0_16] : memref<16x128xf32, #tpu.memory_space<vmem>>, vector<16x128xf32>
    tpu.vector_store %arg4[%c0_15, %c0_16], %50 {strides = array<i32>} : memref<16x128xf32, #tpu.memory_space<vmem>>, vector<16x128xf32>,
    %52 = vector.extract_strided_slice %40 {offsets = [0, 0], sizes = [1, 128], strides = [1, 1]} : vector<16x128xf32> to vector<1x128xf32>
    %cst_17 = arith.constant 2.000000e+00 : f32
    %53 = vector.broadcast %cst_17 : f32 to vector<1x128xf32>
    %54 = arith.mulf %53, %52 : vector<1x128xf32>
    %55 = vector.extract_strided_slice %40 {offsets = [1, 0], sizes = [1, 128], strides = [1, 1]} : vector<16x128xf32> to vector<1x128xf32>
    %56 = arith.addf %54, %55 : vector<1x128xf32>
    %c0_18 = arith.constant 0 : index
    %c0_19 = arith.constant 0 : index
    %57 = vector.load %arg4[%c0_18, %c0_19] : memref<16x128xf32, #tpu.memory_space<vmem>>, vector<1x128xf32>
    tpu.vector_store %arg4[%c0_18, %c0_19], %56 {strides = array<i32>} : memref<16x128xf32, #tpu.memory_space<vmem>>, vector<1x128xf32>,
    %58 = vector.extract_strided_slice %40 {offsets = [14, 0], sizes = [1, 128], strides = [1, 1]} : vector<16x128xf32> to vector<1x128xf32>
    %59 = vector.extract_strided_slice %40 {offsets = [15, 0], sizes = [1, 128], strides = [1, 1]} : vector<16x128xf32> to vector<1x128xf32>
    %cst_20 = arith.constant 2.000000e+00 : f32
    %60 = vector.broadcast %cst_20 : f32 to vector<1x128xf32>
    %61 = arith.mulf %60, %59 : vector<1x128xf32>
    %62 = arith.addf %58, %61 : vector<1x128xf32>
    %c15 = arith.constant 15 : index
    %c0_21 = arith.constant 0 : index
    %63 = vector.load %arg4[%c15, %c0_21] : memref<16x128xf32, #tpu.memory_space<vmem>>, vector<1x128xf32>
    tpu.vector_store %arg4[%c15, %c0_21], %62 {strides = array<i32>} : memref<16x128xf32, #tpu.memory_space<vmem>>, vector<1x128xf32>,
    %c15_i32_22 = arith.constant 15 : i32
    %64 = tpu.dynamic_rotate %44 by %c15_i32_22 dim 0 : vector<16x128xf32>, i32 -> vector<16x128xf32>
    %c1_i32_23 = arith.constant 1 : i32
    %65 = tpu.dynamic_rotate %44 by %c1_i32_23 dim 0 : vector<16x128xf32>, i32 -> vector<16x128xf32>
    %66 = arith.subf %64, %65 : vector<16x128xf32>
    %c0_24 = arith.constant 0 : index
    %c0_25 = arith.constant 0 : index
    %67 = vector.load %arg5[%c0_24, %c0_25] : memref<16x128xf32, #tpu.memory_space<vmem>>, vector<16x128xf32>
    tpu.vector_store %arg5[%c0_24, %c0_25], %66 {strides = array<i32>} : memref<16x128xf32, #tpu.memory_space<vmem>>, vector<16x128xf32>,
    %68 = vector.extract_strided_slice %44 {offsets = [1, 0], sizes = [1, 128], strides = [1, 1]} : vector<16x128xf32> to vector<1x128xf32>
    %c0_26 = arith.constant 0 : index
    %c0_27 = arith.constant 0 : index
    %69 = vector.load %arg5[%c0_26, %c0_27] : memref<16x128xf32, #tpu.memory_space<vmem>>, vector<1x128xf32>
    tpu.vector_store %arg5[%c0_26, %c0_27], %68 {strides = array<i32>} : memref<16x128xf32, #tpu.memory_space<vmem>>, vector<1x128xf32>,
    %70 = vector.extract_strided_slice %44 {offsets = [14, 0], sizes = [1, 128], strides = [1, 1]} : vector<16x128xf32> to vector<1x128xf32>
    %cst_28 = arith.constant 0.000000e+00 : f32
    %71 = vector.broadcast %cst_28 : f32 to vector<1x128xf32>
    %72 = arith.subf %71, %70 : vector<1x128xf32>
    %c15_29 = arith.constant 15 : index
    %c0_30 = arith.constant 0 : index
    %73 = vector.load %arg5[%c15_29, %c0_30] : memref<16x128xf32, #tpu.memory_space<vmem>>, vector<1x128xf32>
    tpu.vector_store %arg5[%c15_29, %c0_30], %72 {strides = array<i32>} : memref<16x128xf32, #tpu.memory_space<vmem>>, vector<1x128xf32>,
    %c0_31 = arith.constant 0 : index
    %c0_32 = arith.constant 0 : index
    %74 = vector.load %arg4[%c0_31, %c0_32] : memref<16x128xf32, #tpu.memory_space<vmem>>, vector<16x128xf32>
    %c0_33 = arith.constant 0 : index
    %c0_34 = arith.constant 0 : index
    %75 = vector.load %arg5[%c0_33, %c0_34] : memref<16x128xf32, #tpu.memory_space<vmem>>, vector<16x128xf32>
    %76 = arith.mulf %74, %74 : vector<16x128xf32>
    %77 = arith.mulf %75, %75 : vector<16x128xf32>
    %78 = arith.addf %76, %77 : vector<16x128xf32>
    %cst_35 = arith.constant 9.99999997E-7 : f32
    %79 = vector.broadcast %cst_35 : f32 to vector<16x128xf32>
    %80 = arith.addf %78, %79 : vector<16x128xf32>
    %81 = math.sqrt %80 : vector<16x128xf32>
    %c1_i32_36 = arith.constant 1 : i32
    %82 = tpu.dynamic_rotate %3 by %c1_i32_36 dim 1 : vector<16x128xf32>, i32 -> vector<16x128xf32>
    %83 = vector.broadcast %29 : vector<1x128xf32> to vector<16x128xf32>
    %84 = arith.mulf %82, %83 : vector<16x128xf32>
    %c127_i32_37 = arith.constant 127 : i32
    %85 = tpu.dynamic_rotate %3 by %c127_i32_37 dim 1 : vector<16x128xf32>, i32 -> vector<16x128xf32>
    %86 = vector.broadcast %33 : vector<1x128xf32> to vector<16x128xf32>
    %87 = arith.mulf %85, %86 : vector<16x128xf32>
    %88 = arith.subf %87, %84 : vector<16x128xf32>
    %cst_38 = arith.constant 2.000000e+00 : f32
    %89 = vector.broadcast %cst_38 : f32 to vector<16x128xf32>
    %90 = arith.mulf %89, %3 : vector<16x128xf32>
    %91 = arith.addf %84, %90 : vector<16x128xf32>
    %92 = arith.addf %91, %87 : vector<16x128xf32>
    %c1_i32_39 = arith.constant 1 : i32
    %93 = tpu.dynamic_rotate %88 by %c1_i32_39 dim 0 : vector<16x128xf32>, i32 -> vector<16x128xf32>
    %cst_40 = arith.constant 2.000000e+00 : f32
    %94 = vector.broadcast %cst_40 : f32 to vector<16x128xf32>
    %95 = arith.mulf %94, %88 : vector<16x128xf32>
    %96 = arith.addf %93, %95 : vector<16x128xf32>
    %c15_i32_41 = arith.constant 15 : i32
    %97 = tpu.dynamic_rotate %88 by %c15_i32_41 dim 0 : vector<16x128xf32>, i32 -> vector<16x128xf32>
    %98 = arith.addf %96, %97 : vector<16x128xf32>
    %c0_42 = arith.constant 0 : index
    %c0_43 = arith.constant 0 : index
    %99 = vector.load %arg4[%c0_42, %c0_43] : memref<16x128xf32, #tpu.memory_space<vmem>>, vector<16x128xf32>
    tpu.vector_store %arg4[%c0_42, %c0_43], %98 {strides = array<i32>} : memref<16x128xf32, #tpu.memory_space<vmem>>, vector<16x128xf32>,
    %100 = vector.extract_strided_slice %88 {offsets = [0, 0], sizes = [1, 128], strides = [1, 1]} : vector<16x128xf32> to vector<1x128xf32>
    %cst_44 = arith.constant 2.000000e+00 : f32
    %101 = vector.broadcast %cst_44 : f32 to vector<1x128xf32>
    %102 = arith.mulf %101, %100 : vector<1x128xf32>
    %103 = vector.extract_strided_slice %88 {offsets = [1, 0], sizes = [1, 128], strides = [1, 1]} : vector<16x128xf32> to vector<1x128xf32>
    %104 = arith.addf %102, %103 : vector<1x128xf32>
    %c0_45 = arith.constant 0 : index
    %c0_46 = arith.constant 0 : index
    %105 = vector.load %arg4[%c0_45, %c0_46] : memref<16x128xf32, #tpu.memory_space<vmem>>, vector<1x128xf32>
    tpu.vector_store %arg4[%c0_45, %c0_46], %104 {strides = array<i32>} : memref<16x128xf32, #tpu.memory_space<vmem>>, vector<1x128xf32>,
    %106 = vector.extract_strided_slice %88 {offsets = [14, 0], sizes = [1, 128], strides = [1, 1]} : vector<16x128xf32> to vector<1x128xf32>
    %107 = vector.extract_strided_slice %88 {offsets = [15, 0], sizes = [1, 128], strides = [1, 1]} : vector<16x128xf32> to vector<1x128xf32>
    %cst_47 = arith.constant 2.000000e+00 : f32
    %108 = vector.broadcast %cst_47 : f32 to vector<1x128xf32>
    %109 = arith.mulf %108, %107 : vector<1x128xf32>
    %110 = arith.addf %106, %109 : vector<1x128xf32>
    %c15_48 = arith.constant 15 : index
    %c0_49 = arith.constant 0 : index
    %111 = vector.load %arg4[%c15_48, %c0_49] : memref<16x128xf32, #tpu.memory_space<vmem>>, vector<1x128xf32>
    tpu.vector_store %arg4[%c15_48, %c0_49], %110 {strides = array<i32>} : memref<16x128xf32, #tpu.memory_space<vmem>>, vector<1x128xf32>,
    %c15_i32_50 = arith.constant 15 : i32
    %112 = tpu.dynamic_rotate %92 by %c15_i32_50 dim 0 : vector<16x128xf32>, i32 -> vector<16x128xf32>
    %c1_i32_51 = arith.constant 1 : i32
    %113 = tpu.dynamic_rotate %92 by %c1_i32_51 dim 0 : vector<16x128xf32>, i32 -> vector<16x128xf32>
    %114 = arith.subf %112, %113 : vector<16x128xf32>
    %c0_52 = arith.constant 0 : index
    %c0_53 = arith.constant 0 : index
    %115 = vector.load %arg5[%c0_52, %c0_53] : memref<16x128xf32, #tpu.memory_space<vmem>>, vector<16x128xf32>
    tpu.vector_store %arg5[%c0_52, %c0_53], %114 {strides = array<i32>} : memref<16x128xf32, #tpu.memory_space<vmem>>, vector<16x128xf32>,
    %116 = vector.extract_strided_slice %92 {offsets = [1, 0], sizes = [1, 128], strides = [1, 1]} : vector<16x128xf32> to vector<1x128xf32>
    %c0_54 = arith.constant 0 : index
    %c0_55 = arith.constant 0 : index
    %117 = vector.load %arg5[%c0_54, %c0_55] : memref<16x128xf32, #tpu.memory_space<vmem>>, vector<1x128xf32>
    tpu.vector_store %arg5[%c0_54, %c0_55], %116 {strides = array<i32>} : memref<16x128xf32, #tpu.memory_space<vmem>>, vector<1x128xf32>,
    %118 = vector.extract_strided_slice %92 {offsets = [14, 0], sizes = [1, 128], strides = [1, 1]} : vector<16x128xf32> to vector<1x128xf32>
    %cst_56 = arith.constant 0.000000e+00 : f32
    %119 = vector.broadcast %cst_56 : f32 to vector<1x128xf32>
    %120 = arith.subf %119, %118 : vector<1x128xf32>
    %c15_57 = arith.constant 15 : index
    %c0_58 = arith.constant 0 : index
    %121 = vector.load %arg5[%c15_57, %c0_58] : memref<16x128xf32, #tpu.memory_space<vmem>>, vector<1x128xf32>
    tpu.vector_store %arg5[%c15_57, %c0_58], %120 {strides = array<i32>} : memref<16x128xf32, #tpu.memory_space<vmem>>, vector<1x128xf32>,
    %c0_59 = arith.constant 0 : index
    %c0_60 = arith.constant 0 : index
    %122 = vector.load %arg4[%c0_59, %c0_60] : memref<16x128xf32, #tpu.memory_space<vmem>>, vector<16x128xf32>
    %c0_61 = arith.constant 0 : index
    %c0_62 = arith.constant 0 : index
    %123 = vector.load %arg5[%c0_61, %c0_62] : memref<16x128xf32, #tpu.memory_space<vmem>>, vector<16x128xf32>
    %124 = arith.mulf %122, %122 : vector<16x128xf32>
    %125 = arith.mulf %123, %123 : vector<16x128xf32>
    %126 = arith.addf %124, %125 : vector<16x128xf32>
    %cst_63 = arith.constant 9.99999997E-7 : f32
    %127 = vector.broadcast %cst_63 : f32 to vector<16x128xf32>
    %128 = arith.addf %126, %127 : vector<16x128xf32>
    %129 = math.sqrt %128 : vector<16x128xf32>
    %130 = arith.subf %81, %129 : vector<16x128xf32>
    %131 = math.absf %130 : vector<16x128xf32>
    %132 = arith.mulf %131, %13 : vector<16x128xf32>
    %133 = vector.shape_cast %132 : vector<16x128xf32> to vector<1x16x128xf32>
    %cst_64 = arith.constant dense<0.000000e+00> : vector<1xf32>
    %134 = vector.multi_reduction <add>, %133, %cst_64 [1, 2] : vector<1x16x128xf32> to vector<1xf32>
    %135 = vector.shape_cast %134 : vector<1xf32> to vector<1x1x1xf32>
    %136 = vector.extract %135[0, 0, 0] : f32 from vector<1x1x1xf32>
    %137 = arith.mulf %24, %24 : vector<16x128xf32>
    %138 = vector.shape_cast %137 : vector<16x128xf32> to vector<1x16x128xf32>
    %cst_65 = arith.constant dense<0.000000e+00> : vector<1xf32>
    %139 = vector.multi_reduction <add>, %138, %cst_65 [1, 2] : vector<1x16x128xf32> to vector<1xf32>
    %140 = vector.shape_cast %139 : vector<1xf32> to vector<1x1x1xf32>
    %141 = vector.extract %140[0, 0, 0] : f32 from vector<1x1x1xf32>
    %142 = vector.shape_cast %24 : vector<16x128xf32> to vector<1x16x128xf32>
    %cst_66 = arith.constant dense<0.000000e+00> : vector<1xf32>
    %143 = vector.multi_reduction <add>, %142, %cst_66 [1, 2] : vector<1x16x128xf32> to vector<1xf32>
    %144 = vector.shape_cast %143 : vector<1xf32> to vector<1x1x1xf32>
    %145 = vector.extract %144[0, 0, 0] : f32 from vector<1x1x1xf32>
    %146 = vector.shape_cast %13 : vector<16x128xf32> to vector<1x16x128xf32>
    %cst_67 = arith.constant dense<0.000000e+00> : vector<1xf32>
    %147 = vector.multi_reduction <add>, %146, %cst_67 [1, 2] : vector<1x16x128xf32> to vector<1xf32>
    %148 = vector.shape_cast %147 : vector<1xf32> to vector<1x1x1xf32>
    %149 = vector.extract %148[0, 0, 0] : f32 from vector<1x1x1xf32>
    %150 = tpu.iota {dimensions = array<i32: 2>} : vector<1x1x128xi32>
    %c0_i32_68 = arith.constant 0 : i32
    %151 = vector.broadcast %c0_i32_68 : i32 to vector<1x1x128xi32>
    %152 = arith.cmpi eq, %150, %151 : vector<1x1x128xi32>
    %cst_69 = arith.constant 0.000000e+00 : f32
    %153 = vector.broadcast %141 : f32 to vector<1x1x128xf32>
    %154 = vector.broadcast %cst_69 : f32 to vector<1x1x128xf32>
    %155 = arith.select %152, %153, %154 : vector<1x1x128xi1>, vector<1x1x128xf32>
    %c1_i32_70 = arith.constant 1 : i32
    %156 = vector.broadcast %c1_i32_70 : i32 to vector<1x1x128xi32>
    %157 = arith.cmpi eq, %150, %156 : vector<1x1x128xi32>
    %cst_71 = arith.constant 0.000000e+00 : f32
    %158 = vector.broadcast %145 : f32 to vector<1x1x128xf32>
    %159 = vector.broadcast %cst_71 : f32 to vector<1x1x128xf32>
    %160 = arith.select %157, %158, %159 : vector<1x1x128xi1>, vector<1x1x128xf32>
    %161 = arith.addf %155, %160 : vector<1x1x128xf32>
    %c2_i32 = arith.constant 2 : i32
    %162 = vector.broadcast %c2_i32 : i32 to vector<1x1x128xi32>
    %163 = arith.cmpi eq, %150, %162 : vector<1x1x128xi32>
    %cst_72 = arith.constant 0.000000e+00 : f32
    %164 = vector.broadcast %149 : f32 to vector<1x1x128xf32>
    %165 = vector.broadcast %cst_72 : f32 to vector<1x1x128xf32>
    %166 = arith.select %163, %164, %165 : vector<1x1x128xi1>, vector<1x1x128xf32>
    %167 = arith.addf %161, %166 : vector<1x1x128xf32>
    %c3_i32 = arith.constant 3 : i32
    %168 = vector.broadcast %c3_i32 : i32 to vector<1x1x128xi32>
    %169 = arith.cmpi eq, %150, %168 : vector<1x1x128xi32>
    %cst_73 = arith.constant 0.000000e+00 : f32
    %170 = vector.broadcast %136 : f32 to vector<1x1x128xf32>
    %171 = vector.broadcast %cst_73 : f32 to vector<1x1x128xf32>
    %172 = arith.select %169, %170, %171 : vector<1x1x128xi1>, vector<1x1x128xf32>
    %173 = arith.addf %167, %172 : vector<1x1x128xf32>
    %c0_74 = arith.constant 0 : index
    %c0_75 = arith.constant 0 : index
    %c0_76 = arith.constant 0 : index
    %174 = vector.load %arg3[%c0_74, %c0_75, %c0_76] : memref<1x1x128xf32, #tpu.memory_space<vmem>>, vector<1x1x128xf32>
    tpu.vector_store %arg3[%c0_74, %c0_75, %c0_76], %173 {strides = array<i32>} : memref<1x1x128xf32, #tpu.memory_space<vmem>>, vector<1x1x128xf32>,
    return
  }
  func.func @transform_0(%arg0: i32) -> (i32, i32, i32) {
    %c0_i32 = arith.constant 0 : i32
    %c0_i32_0 = arith.constant 0 : i32
    %c0_i32_1 = arith.constant 0 : i32
    return %arg0, %c0_i32, %c0_i32_0 : i32, i32, i32
  }
  func.func @transform_1(%arg0: i32) -> (i32, i32, i32) {
    %c0_i32 = arith.constant 0 : i32
    %c0_i32_0 = arith.constant 0 : i32
    %c0_i32_1 = arith.constant 0 : i32
    return %arg0, %c0_i32, %c0_i32_0 : i32, i32, i32
  }
  func.func @transform_2(%arg0: i32) -> (i32, i32, i32) {
    %c0_i32 = arith.constant 0 : i32
    %c0_i32_0 = arith.constant 0 : i32
    %c0_i32_1 = arith.constant 0 : i32
    return %arg0, %c0_i32, %c0_i32_0 : i32, i32, i32
  }
}

</mosaic_0001>

<llo_original>
// kernel: tpu_custom_call.1
$region0: #{tpu_custom_call.1}
  #allocation0 [shape = 'u32[]', space=smem, size = 0x4, offset = 0x4, fixed_abs, tag = 'smem constant byte address 0x4 - core index']
  #allocation1 [shape = 'u32[72,128]{1,0:T(1,128)}', space=vmem, size = 0x9000, scoped, tag = 'internal scratch']
  #allocation2 [shape = 'f32[16,128]{1,0:T(8,128)}', space=vmem, size = 0x2000, scoped, tag = 'scratch operand']
  #allocation3 [shape = 'f32[16,128]{1,0:T(8,128)}', space=vmem, size = 0x2000, scoped, tag = 'scratch operand']
  %s0 = inlined_call_operand.hbm [shape: f32[2,16,128], index: 0, kind: input, shape index: {}]
  %s1 = inlined_call_operand.hbm [shape: f32[2,16,128], index: 1, kind: input, shape index: {}]
  %s2 = inlined_call_operand.hbm [shape: f32[2,1,128], index: 2, kind: output, shape index: {}]
  %s3 = sld [smem:[#allocation0]]
  $region49: #{tpu_custom_call.1} parent=0
    _
  %s5 = ssub.s32 1, %s3
  %s6 = scalar_select 0, %s5, %s3
  $region1: #{tpu_custom_call.1} parent=0
    #allocation4 [shape = 'u8[16384]{0}', space=vmem, size = 0x4000, scoped, tag = 'input window, operand 0']
    #allocation5 [shape = 's32[2]{0}', space=sflag, size = 0x8, scoped, tag = 'scoped memory for tpu_custom_call.1']
    #allocation6 [shape = 's32[2]{0}', space=sflag, size = 0x8, scoped, tag = 'scoped memory for tpu_custom_call.1']
    #allocation7 [shape = 'u8[16384]{0}', space=vmem, size = 0x4000, scoped, tag = 'input window, operand 1']
    #allocation8 [shape = 's32[2]{0}', space=sflag, size = 0x8, scoped, tag = 'scoped memory for tpu_custom_call.1']
    #allocation9 [shape = 'u8[1024]{0}', space=vmem, size = 0x400, scoped, tag = 'output window, operand 0']
    %7 = vsyncpa [#allocation5], 0
    %s8 = scalar_lea.sflag [#allocation5], 1
    %9 = vsyncpa %s8, 0
    %10 = vsyncpa [#allocation8], 0
    %s11 = scalar_lea.sflag [#allocation8], 1
    %12 = vsyncpa %s11, 0
    %13 = vsyncpa [#allocation6], 0
    %s14 = scalar_lea.sflag [#allocation6], 1
    %15 = vsyncpa %s14, 0
    loop: start=0, step=1, limit=4
    $region2: #{tpu_custom_call.1} parent=1 // loop_pre_header
      _
    $region3: #{tpu_custom_call.1} parent=1 // loop_header
      %s17 = sphi 0, %s21
      %p18 = scmp.ge.s32.totalorder %s17, 4
      %s27 = sphi 0, %s29
      %s30 = sphi 0, %s27
      %s31 = sphi 0, %s30
      %s47 = sphi 0, %s31
      %s53 = sphi 0, %s55
      %s56 = sphi 0, %s53
      %s57 = sphi 0, %s56
      %s73 = sphi 0, %s57
      %s79 = sphi 0, %s81
      %s82 = sphi 0, %s79
      %s83 = sphi 0, %s82
      %s99 = sphi 0, %s83
    $region4: #{tpu_custom_call.1} parent=1 // loop_header_branch
      %20 = sbr.rel (%p18) target = $region8
    $region5: #{tpu_custom_call.1} parent=1 // loop_body
      %s22 = ssub.s32 %s17, 1
      %s23 = ssub.s32 %s17, 2
      %s24 = sadd.s32 %s17, 1
      %s25 = ssub.s32 %s17, %s24
      %p26 = scmp.eq.s32.totalorder %s25, 0
      %s28 = sadd.s32 %s27, 1
      %s29 = scalar_select %p26, %s27, %s28
      %p32 = pneg %p26
      %p33 = scmp.eq.s32.totalorder %s17, 1
      %p34 = por %p32, %p33
      %p35 = scmp.ne.s32.totalorder %s27, %s30
      %p36 = scmp.eq.s32.totalorder %s17, 0
      %p37 = por %p35, %p36
      %p38 = scmp.ne.s32.totalorder %s27, %s30
      %p39 = scmp.eq.s32.totalorder %s22, 1
      %p40 = por %p38, %p39
      %p41 = scmp.ne.s32.totalorder %s30, %s31
      %p42 = scmp.eq.s32.totalorder %s22, 0
      %p43 = por %p41, %p42
      %p44 = scmp.ne.s32.totalorder %s30, %s31
      %p45 = scmp.eq.s32.totalorder %s23, 1
      %p46 = por %p44, %p45
      %p48 = scmp.ne.s32.totalorder %s31, %s47
      %p49 = scmp.eq.s32.totalorder %s23, 0
      %p50 = por %p48, %p49
      %s51 = ssub.s32 %s17, %s24
      %p52 = scmp.eq.s32.totalorder %s51, 0
      %s54 = sadd.s32 %s53, 1
      %s55 = scalar_select %p52, %s53, %s54
      %p58 = pneg %p52
      %p59 = scmp.eq.s32.totalorder %s17, 1
      %p60 = por %p58, %p59
      %p61 = scmp.ne.s32.totalorder %s53, %s56
      %p62 = scmp.eq.s32.totalorder %s17, 0
      %p63 = por %p61, %p62
      %p64 = scmp.ne.s32.totalorder %s53, %s56
      %p65 = scmp.eq.s32.totalorder %s22, 1
      %p66 = por %p64, %p65
      %p67 = scmp.ne.s32.totalorder %s56, %s57
      %p68 = scmp.eq.s32.totalorder %s22, 0
      %p69 = por %p67, %p68
      %p70 = scmp.ne.s32.totalorder %s56, %s57
      %p71 = scmp.eq.s32.totalorder %s23, 1
      %p72 = por %p70, %p71
      %p74 = scmp.ne.s32.totalorder %s57, %s73
      %p75 = scmp.eq.s32.totalorder %s23, 0
      %p76 = por %p74, %p75
      %s77 = ssub.s32 %s17, %s24
      %p78 = scmp.eq.s32.totalorder %s77, 0
      %s80 = sadd.s32 %s79, 1
      %s81 = scalar_select %p78, %s79, %s80
      %p84 = pneg %p78
      %p85 = scmp.eq.s32.totalorder %s17, 1
      %p86 = por %p84, %p85
      %p87 = scmp.ne.s32.totalorder %s79, %s82
      %p88 = scmp.eq.s32.totalorder %s17, 0
      %p89 = por %p87, %p88
      %p90 = scmp.ne.s32.totalorder %s79, %s82
      %p91 = scmp.eq.s32.totalorder %s22, 1
      %p92 = por %p90, %p91
      %p93 = scmp.ne.s32.totalorder %s82, %s83
      %p94 = scmp.eq.s32.totalorder %s22, 0
      %p95 = por %p93, %p94
      %p96 = scmp.ne.s32.totalorder %s82, %s83
      %p97 = scmp.eq.s32.totalorder %s23, 1
      %p98 = por %p96, %p97
      %p100 = scmp.ne.s32.totalorder %s83, %s99
      %p101 = scmp.eq.s32.totalorder %s23, 0
      %p102 = por %p100, %p101
      %p103 = scmp.le.s32.totalorder 1, %s17
      %p104 = scmp.lt.s32.totalorder %s17, 3
      %p105 = pnand %p103, %p104
      %p106 = pneg %p105
      // Predicated region
      $region9: #{tpu_custom_call.1} parent=5 // pred_check
        _
      $region10: #{tpu_custom_call.1} parent=5 // pred_check_branch
        %108 = sbr.rel (%p105) target = $region12
      $region11: #{tpu_custom_call.1} parent=5 // pred_region
        %s109 = ssub.s32 %s17, 1
      $region12: #{tpu_custom_call.1} parent=5 // pred_fallthru
        _
      %p110 = scmp.lt.s32.totalorder %s17, 2
      // Predicated region
      $region13: #{tpu_custom_call.1} parent=5 // pred_check
        %p111 = pneg %p110
      $region14: #{tpu_custom_call.1} parent=5 // pred_check_branch
        %113 = sbr.rel (%p111) target = $region16
      $region15: #{tpu_custom_call.1} parent=5 // pred_region
        // Predicated region
        $region17: #{tpu_custom_call.1} parent=15 // pred_check
          %p114 = pneg %p37
        $region18: #{tpu_custom_call.1} parent=15 // pred_check_branch
          %116 = sbr.rel (%p114) target = $region20
        $region19: #{tpu_custom_call.1} parent=15 // pred_region
          %s117 = sand.u32 %s27, 1
          %s118 = scalar_lea.sflag [#allocation5], %s117
          %s119 = sand.u32 %s27, 1
          %s120 = smul.addr %s119, 16
          %s121 = scalar_lea.vmem [#allocation4], %s120
          %123 = vsyncadd %s118, 0
          %s124 = smul.addr %s17, 2
          %s125 = smul.addr %s124, 8
          %s126 = scalar_lea.hbm %s0, %s125
          %s127 = sshll.u32 %s126, 4
          %s128 = int_to_ptr.hbm [resolvable:$true] %s127
          %s129 = sshll.u32 %s121, 4
          %s130 = int_to_ptr.vmem [resolvable:$true] %s129
          %135 = dma.hbm_to_vmem [thread:$0]  %s128, 256, %s130, %s118, 128, 128, 8
        $region20: #{tpu_custom_call.1} parent=15 // pred_fallthru
          _
        // Predicated region
        $region21: #{tpu_custom_call.1} parent=15 // pred_check
          %p136 = pneg %p63
        $region22: #{tpu_custom_call.1} parent=15 // pred_check_branch
          %138 = sbr.rel (%p136) target = $region24
        $region23: #{tpu_custom_call.1} parent=15 // pred_region
          %s139 = sand.u32 %s53, 1
          %s140 = scalar_lea.sflag [#allocation8], %s139
          %s141 = sand.u32 %s53, 1
          %s142 = smul.addr %s141, 16
          %s143 = scalar_lea.vmem [#allocation7], %s142
          %145 = vsyncadd %s140, 0
          %s146 = smul.addr %s17, 2
          %s147 = smul.addr %s146, 8
          %s148 = scalar_lea.hbm %s1, %s147
          %s149 = sshll.u32 %s148, 4
          %s150 = int_to_ptr.hbm [resolvable:$true] %s149
          %s151 = sshll.u32 %s143, 4
          %s152 = int_to_ptr.vmem [resolvable:$true] %s151
          %157 = dma.hbm_to_vmem [thread:$0]  %s150, 256, %s152, %s140, 128, 128, 8
        $region24: #{tpu_custom_call.1} parent=15 // pred_fallthru
          _
      $region16: #{tpu_custom_call.1} parent=5 // pred_fallthru
        _
      %p158 = scmp.le.s32.totalorder 1, %s17
      %p159 = scmp.lt.s32.totalorder %s17, 3
      %p160 = pnand %p158, %p159
      %p161 = pneg %p160
      // Predicated region
      $region25: #{tpu_custom_call.1} parent=5 // pred_check
        _
      $region26: #{tpu_custom_call.1} parent=5 // pred_check_branch
        %163 = sbr.rel (%p160) target = $region28
      $region27: #{tpu_custom_call.1} parent=5 // pred_region
        %s164 = ssub.s32 %s17, 1
        %s165 = sand.u32 %s30, 1
        %s166 = scalar_lea.sflag [#allocation5], %s165
        %s167 = sand.u32 %s30, 1
        %s168 = smul.addr %s167, 16
        %s169 = scalar_lea.vmem [#allocation4], %s168
        // Predicated region
        $region29: #{tpu_custom_call.1} parent=27 // pred_check
          %p170 = pneg %p43
        $region30: #{tpu_custom_call.1} parent=27 // pred_check_branch
          %172 = sbr.rel (%p170) target = $region32
        $region31: #{tpu_custom_call.1} parent=27 // pred_region
          %174 = dma.done %s166, 256
        $region32: #{tpu_custom_call.1} parent=27 // pred_fallthru
          _
        %s175 = sand.u32 %s56, 1
        %s176 = scalar_lea.sflag [#allocation8], %s175
        %s177 = sand.u32 %s56, 1
        %s178 = smul.addr %s177, 16
        %s179 = scalar_lea.vmem [#allocation7], %s178
        // Predicated region
        $region33: #{tpu_custom_call.1} parent=27 // pred_check
          %p180 = pneg %p69
        $region34: #{tpu_custom_call.1} parent=27 // pred_check_branch
          %182 = sbr.rel (%p180) target = $region36
        $region35: #{tpu_custom_call.1} parent=27 // pred_region
          %184 = dma.done %s176, 256
        $region36: #{tpu_custom_call.1} parent=27 // pred_fallthru
          _
        %s185 = sand.u32 %s30, 1
        %s186 = scalar_lea.sflag [#allocation5], %s185
        %s187 = sand.u32 %s30, 1
        %s188 = smul.addr %s187, 16
        %s189 = scalar_lea.vmem [#allocation4], %s188
        %p190 = pneg %p43
        %p191 = pneg %p40
        %s192 = sand.u32 %s56, 1
        %s193 = scalar_lea.sflag [#allocation8], %s192
        %s194 = sand.u32 %s56, 1
        %s195 = smul.addr %s194, 16
        %s196 = scalar_lea.vmem [#allocation7], %s195
        %p197 = pneg %p69
        %p198 = pneg %p66
        %p199 = pneg %p95
        %p200 = pneg %p92
        %s201 = sand.u32 %s82, 1
        %s202 = scalar_lea.sflag [#allocation6], %s201
        %s203 = sand.u32 %s82, 1
        %s204 = scalar_lea.vmem [#allocation9], %s203
        %v205 = vld [vmem:[%s169] sm:$0xff]
        %v206 = vld [vmem:[%s169 + $0x8] sm:$0xff]
        %v207 = vld [vmem:[%s179] sm:$0xff]
        %v208 = vld [vmem:[%s179 + $0x8] sm:$0xff]
        %vm209 = vcmp.gt.f32.partialorder %v207, 0.0
        %vm210 = vcmp.gt.f32.partialorder %v208, 0.0
        %vm211 = vweird.f32 %v207
        %vm212 = vweird.f32 %v208
        %vm213 = vmxor %vm211, 1
        %vm214 = vmxor %vm212, 1
        %vm215 = vmand %vm209, %vm213
        %vm216 = vmand %vm210, %vm214
        %vm217 = vweird.f32 %v205
        %vm218 = vweird.f32 %v206
        %vm219 = vmxor %vm217, 1
        %vm220 = vmxor %vm218, 1
        %vm221 = vmand %vm215, %vm219
        %vm222 = vmand %vm216, %vm220
        %v223 = vsel %vm221, 1, 0
        %v224 = vsel %vm222, 1, 0
        %v225 = vcvt.s32.f32 %v223
        %v226 = vcvt.s32.f32 %v224
        %v227 = vsel %vm221, %v205, 1.0
        %v228 = vsel %vm222, %v206, 1.0
        %v229 = vadd.f32 %v227, 1e-06
        %v230 = vadd.f32 %v228, 1e-06
        %v231 = vlog2.pop %v229
        %v232 = vmul.f32 %v231, 0.6931472
        %v233 = vlog2.pop %v230
        %v234 = vmul.f32 %v233, 0.6931472
        %v235 = vsel %vm221, %v207, 1.0
        %v236 = vsel %vm222, %v208, 1.0
        %v237 = vadd.f32 %v235, 1e-06
        %v238 = vadd.f32 %v236, 1e-06
        %v239 = vlog2.pop %v237
        %v240 = vmul.f32 %v239, 0.6931472
        %v241 = vlog2.pop %v238
        %v242 = vmul.f32 %v241, 0.6931472
        %v243 = vsub.f32 %v232, %v240
        %v244 = vsub.f32 %v234, %v242
        %v245 = vlaneseq
        %v246 = vand.u32 %v245, 127
        %vm247 = vcmp.gt.s32.totalorder %v246, 0
        %v248 = vsel %vm247, 1, 0
        %v249 = vcvt.s32.f32 %v248
        %vm250 = vcmp.lt.s32.totalorder %v246, 127
        %v251 = vsel %vm250, 1, 0
        %v252 = vcvt.s32.f32 %v251
        %253 = vrot.lane.b32.xlu0 %v205, 1
        %v254 = vpop.permute.xlu0 %253
        %255 = vrot.lane.b32.xlu0 %v206, 1
        %v256 = vpop.permute.xlu0 %255
        %v257 = vmul.f32 %v254, %v249
        %v258 = vmul.f32 %v256, %v249
        %259 = vrot.lane.b32.xlu0 %v205, 127
        %v260 = vpop.permute.xlu0 %259
        %261 = vrot.lane.b32.xlu0 %v206, 127
        %v262 = vpop.permute.xlu0 %261
        %v263 = vmul.f32 %v260, %v252
        %v264 = vmul.f32 %v262, %v252
        %v265 = vsub.f32 %v263, %v257
        %v266 = vsub.f32 %v264, %v258
        %v267 = vmul.f32 %v205, 2.0
        %v268 = vmul.f32 %v206, 2.0
        %v269 = vadd.f32 %v257, %v267
        %v270 = vadd.f32 %v258, %v268
        %v271 = vadd.f32 %v269, %v263
        %v272 = vadd.f32 %v270, %v264
        %v273 = vrot.slane %v265, 7
        %v274 = vrot.slane %v266, 7
        %v275 = vlaneseq
        %v276 = vshrl.u32 %v275, 7
        %vm277 = vcmp.lt.s32.totalorder %v276, 1
        %v278 = vsel %vm277, %v273, %v274
        %v279 = vsel %vm277, %v274, %v273
        %v280 = vmul.f32 %v265, 2.0
        %v281 = vmul.f32 %v266, 2.0
        %v282 = vadd.f32 %v279, %v280
        %v283 = vadd.f32 %v278, %v281
        %v284 = vrot.slane %v265, 1
        %v285 = vrot.slane %v266, 1
        %vm286 = vcmp.lt.s32.totalorder %v276, 7
        %v287 = vsel %vm286, %v284, %v285
        %v288 = vsel %vm286, %v285, %v284
        %v289 = vadd.f32 %v282, %v287
        %v290 = vadd.f32 %v283, %v288
        %291 = vst [vmem:[#allocation2] sm:$0xff] %v289
        %292 = vst [vmem:[#allocation2 + $0x8] sm:$0xff] %v290
        %v294 = vrot.slane %v265, 1
        %v296 = vadd.f32 %v280, %v294
        %297 = vst [vmem:[#allocation2] sm:$0x1] %v296
        %v299 = vrot.slane %v281, 1
        %v301 = vadd.f32 %v266, %v299
        %302 = vst [vmem:[#allocation2 + $0x9] sm:$0x40] %v301
        %v303 = vrot.slane %v271, 1
        %v304 = vrot.slane %v272, 1
        %v305 = vsel %vm286, %v303, %v304
        %v306 = vsel %vm286, %v304, %v303
        %v307 = vrot.slane %v271, 7
        %v308 = vrot.slane %v272, 7
        %v309 = vsel %vm277, %v307, %v308
        %v310 = vsel %vm277, %v308, %v307
        %v311 = vsub.f32 %v305, %v310
        %v312 = vsub.f32 %v306, %v309
        %313 = vst [vmem:[#allocation3] sm:$0xff] %v311
        %314 = vst [vmem:[#allocation3 + $0x8] sm:$0xff] %v312
        %315 = vst [vmem:[#allocation3 - $0x1] sm:$0x2] %v271
        %v316 = vsub.f32 0.0, %v272
        %317 = vst [vmem:[#allocation3 + $0x9] sm:$0x40] %v316
        %v318 = vld [vmem:[#allocation2] sm:$0xff]
        %v319 = vld [vmem:[#allocation2 + $0x8] sm:$0xff]
        %v320 = vld [vmem:[#allocation3] sm:$0xff]
        %v321 = vld [vmem:[#allocation3 + $0x8] sm:$0xff]
        %v322 = vmul.f32 %v318, %v318
        %v323 = vmul.f32 %v319, %v319
        %v324 = vmul.f32 %v320, %v320
        %v325 = vmul.f32 %v321, %v321
        %v326 = vadd.f32 %v322, %v324
        %v327 = vadd.f32 %v323, %v325
        %v328 = vadd.f32 %v326, 1e-06
        %v329 = vadd.f32 %v327, 1e-06
        %v330 = vrsqrt.pop %v328
        %v331 = vmul.f32 %v330, %v328
        %v332 = vmul.f32 %v331, %v330
        %v333 = vmul.f32 0.5, %v332
        %v334 = vsub.f32 1.5, %v333
        %v335 = vmul.f32 %v330, %v334
        %v336 = vmul.f32 %v328, %v335
        %vm337 = vcmp.eq.f32.partialorder %v328, inf
        %v338 = vsel %vm337, %v328, %v336
        %vm339 = vcmp.eq.f32.partialorder %v328, 0.0
        %v340 = vand.u32 %v328, 2147483648
        %v341 = vsel %vm339, %v340, %v338
        %v342 = vrsqrt.pop %v329
        %v343 = vmul.f32 %v342, %v329
        %v344 = vmul.f32 %v343, %v342
        %v345 = vmul.f32 0.5, %v344
        %v346 = vsub.f32 1.5, %v345
        %v347 = vmul.f32 %v342, %v346
        %v348 = vmul.f32 %v329, %v347
        %vm349 = vcmp.eq.f32.partialorder %v329, inf
        %v350 = vsel %vm349, %v329, %v348
        %vm351 = vcmp.eq.f32.partialorder %v329, 0.0
        %v352 = vand.u32 %v329, 2147483648
        %v353 = vsel %vm351, %v352, %v350
        %354 = vrot.lane.b32.xlu0 %v207, 1
        %v355 = vpop.permute.xlu0 %354
        %356 = vrot.lane.b32.xlu0 %v208, 1
        %v357 = vpop.permute.xlu0 %356
        %v358 = vmul.f32 %v355, %v249
        %v359 = vmul.f32 %v357, %v249
        %360 = vrot.lane.b32.xlu0 %v207, 127
        %v361 = vpop.permute.xlu0 %360
        %362 = vrot.lane.b32.xlu0 %v208, 127
        %v363 = vpop.permute.xlu0 %362
        %v364 = vmul.f32 %v361, %v252
        %v365 = vmul.f32 %v363, %v252
        %v366 = vsub.f32 %v364, %v358
        %v367 = vsub.f32 %v365, %v359
        %v368 = vmul.f32 %v207, 2.0
        %v369 = vmul.f32 %v208, 2.0
        %v370 = vadd.f32 %v358, %v368
        %v371 = vadd.f32 %v359, %v369
        %v372 = vadd.f32 %v370, %v364
        %v373 = vadd.f32 %v371, %v365
        %v374 = vrot.slane %v366, 7
        %v375 = vrot.slane %v367, 7
        %v376 = vsel %vm277, %v374, %v375
        %v377 = vsel %vm277, %v375, %v374
        %v378 = vmul.f32 %v366, 2.0
        %v379 = vmul.f32 %v367, 2.0
        %v380 = vadd.f32 %v377, %v378
        %v381 = vadd.f32 %v376, %v379
        %v382 = vrot.slane %v366, 1
        %v383 = vrot.slane %v367, 1
        %v384 = vsel %vm286, %v382, %v383
        %v385 = vsel %vm286, %v383, %v382
        %v386 = vadd.f32 %v380, %v384
        %v387 = vadd.f32 %v381, %v385
        %388 = vst [vmem:[#allocation2] sm:$0xff] %v386
        %389 = vst [vmem:[#allocation2 + $0x8] sm:$0xff] %v387
        %v391 = vrot.slane %v366, 1
        %v393 = vadd.f32 %v378, %v391
        %394 = vst [vmem:[#allocation2] sm:$0x1] %v393
        %v396 = vrot.slane %v379, 1
        %v398 = vadd.f32 %v367, %v396
        %399 = vst [vmem:[#allocation2 + $0x9] sm:$0x40] %v398
        %v400 = vrot.slane %v372, 1
        %v401 = vrot.slane %v373, 1
        %v402 = vsel %vm286, %v400, %v401
        %v403 = vsel %vm286, %v401, %v400
        %v404 = vrot.slane %v372, 7
        %v405 = vrot.slane %v373, 7
        %v406 = vsel %vm277, %v404, %v405
        %v407 = vsel %vm277, %v405, %v404
        %v408 = vsub.f32 %v402, %v407
        %v409 = vsub.f32 %v403, %v406
        %410 = vst [vmem:[#allocation3] sm:$0xff] %v408
        %411 = vst [vmem:[#allocation3 + $0x8] sm:$0xff] %v409
        %412 = vst [vmem:[#allocation3 - $0x1] sm:$0x2] %v372
        %v413 = vsub.f32 0.0, %v373
        %414 = vst [vmem:[#allocation3 + $0x9] sm:$0x40] %v413
        %v415 = vld [vmem:[#allocation2] sm:$0xff]
        %v416 = vld [vmem:[#allocation2 + $0x8] sm:$0xff]
        %v417 = vld [vmem:[#allocation3] sm:$0xff]
        %v418 = vld [vmem:[#allocation3 + $0x8] sm:$0xff]
        %v419 = vmul.f32 %v415, %v415
        %v420 = vmul.f32 %v416, %v416
        %v421 = vmul.f32 %v417, %v417
        %v422 = vmul.f32 %v418, %v418
        %v423 = vadd.f32 %v419, %v421
        %v424 = vadd.f32 %v420, %v422
        %v425 = vadd.f32 %v423, 1e-06
        %v426 = vadd.f32 %v424, 1e-06
        %v427 = vrsqrt.pop %v425
        %v428 = vmul.f32 %v427, %v425
        %v429 = vmul.f32 %v428, %v427
        %v430 = vmul.f32 0.5, %v429
        %v431 = vsub.f32 1.5, %v430
        %v432 = vmul.f32 %v427, %v431
        %v433 = vmul.f32 %v425, %v432
        %vm434 = vcmp.eq.f32.partialorder %v425, inf
        %v435 = vsel %vm434, %v425, %v433
        %vm436 = vcmp.eq.f32.partialorder %v425, 0.0
        %v437 = vand.u32 %v425, 2147483648
        %v438 = vsel %vm436, %v437, %v435
        %v439 = vrsqrt.pop %v426
        %v440 = vmul.f32 %v439, %v426
        %v441 = vmul.f32 %v440, %v439
        %v442 = vmul.f32 0.5, %v441
        %v443 = vsub.f32 1.5, %v442
        %v444 = vmul.f32 %v439, %v443
        %v445 = vmul.f32 %v426, %v444
        %vm446 = vcmp.eq.f32.partialorder %v426, inf
        %v447 = vsel %vm446, %v426, %v445
        %vm448 = vcmp.eq.f32.partialorder %v426, 0.0
        %v449 = vand.u32 %v426, 2147483648
        %v450 = vsel %vm448, %v449, %v447
        %v451 = vsub.f32 %v341, %v438
        %v452 = vsub.f32 %v353, %v450
        %v453 = vand.u32 2147483647, %v451
        %v454 = vand.u32 2147483647, %v452
        %v455 = vmul.f32 %v453, %v225
        %v456 = vmul.f32 %v454, %v226
        %v457 = vadd.f32 %v455, %v456
        %458 = vadd.xlane.f32.xlu0 %v457
        %v459 = vpop.xlane.xlu0 %458
        %v460 = vrot.slane %v459, 4
        %v461 = vadd.f32 %v459, %v460
        %v462 = vrot.slane %v461, 2
        %v463 = vadd.f32 %v461, %v462
        %v464 = vrot.slane %v463, 1
        %v465 = vadd.f32 %v463, %v464
        %s466 = vtos %v465
        %v467 = vmul.f32 %v243, %v243
        %v468 = vmul.f32 %v244, %v244
        %v469 = vadd.f32 %v467, %v468
        %470 = vadd.xlane.f32.xlu0 %v469
        %v471 = vpop.xlane.xlu0 %470
        %v472 = vrot.slane %v471, 4
        %v473 = vadd.f32 %v471, %v472
        %v474 = vrot.slane %v473, 2
        %v475 = vadd.f32 %v473, %v474
        %v476 = vrot.slane %v475, 1
        %v477 = vadd.f32 %v475, %v476
        %s478 = vtos %v477
        %v479 = vadd.f32 %v243, %v244
        %480 = vadd.xlane.f32.xlu0 %v479
        %v481 = vpop.xlane.xlu0 %480
        %v482 = vrot.slane %v481, 4
        %v483 = vadd.f32 %v481, %v482
        %v484 = vrot.slane %v483, 2
        %v485 = vadd.f32 %v483, %v484
        %v486 = vrot.slane %v485, 1
        %v487 = vadd.f32 %v485, %v486
        %s488 = vtos %v487
        %v489 = vadd.f32 %v225, %v226
        %490 = vadd.xlane.f32.xlu0 %v489
        %v491 = vpop.xlane.xlu0 %490
        %v492 = vrot.slane %v491, 4
        %v493 = vadd.f32 %v491, %v492
        %v494 = vrot.slane %v493, 2
        %v495 = vadd.f32 %v493, %v494
        %v496 = vrot.slane %v495, 1
        %v497 = vadd.f32 %v495, %v496
        %s498 = vtos %v497
        %vm499 = vcmp.eq.s32.totalorder %v246, 0
        %v500 = vstv %s478
        %v501 = vsel %vm499, %v500, 0.0
        %vm502 = vcmp.eq.s32.totalorder %v246, 1
        %v503 = vstv %s488
        %v504 = vsel %vm502, %v503, 0.0
        %v505 = vadd.f32 %v501, %v504
        %vm506 = vcmp.eq.s32.totalorder %v246, 2
        %v507 = vstv %s498
        %v508 = vsel %vm506, %v507, 0.0
        %v509 = vadd.f32 %v505, %v508
        %vm510 = vcmp.eq.s32.totalorder %v246, 3
        %v511 = vstv %s466
        %v512 = vsel %vm510, %v511, 0.0
        %v513 = vadd.f32 %v509, %v512
        %514 = vst [vmem:[%s204] sm:$0x1] %v513
        %s515 = sand.u32 %s82, 1
        %s516 = scalar_lea.sflag [#allocation6], %s515
        %s517 = sand.u32 %s82, 1
        %s518 = scalar_lea.vmem [#allocation9], %s517
        // Predicated region
        $region37: #{tpu_custom_call.1} parent=27 // pred_check
          %p519 = pneg %p92
        $region38: #{tpu_custom_call.1} parent=27 // pred_check_branch
          %521 = sbr.rel (%p519) target = $region40
        $region39: #{tpu_custom_call.1} parent=27 // pred_region
          %523 = vsyncadd %s516, 0
          %s524 = scalar_lea.hbm %s2, %s22
          %s526 = sshll.u32 %s518, 4
          %s527 = int_to_ptr.vmem [resolvable:$true] %s526
          %s528 = sshll.u32 %s524, 4
          %s529 = int_to_ptr.hbm [resolvable:$true] %s528
          %531 = dma.vmem_to_hbm [thread:$0]  %s527, 16, %s529, %s516
        $region40: #{tpu_custom_call.1} parent=27 // pred_fallthru
          _
      $region28: #{tpu_custom_call.1} parent=5 // pred_fallthru
        _
      %p532 = scmp.le.s32.totalorder 2, %s17
      // Predicated region
      $region41: #{tpu_custom_call.1} parent=5 // pred_check
        %p533 = pneg %p532
      $region42: #{tpu_custom_call.1} parent=5 // pred_check_branch
        %535 = sbr.rel (%p533) target = $region44
      $region43: #{tpu_custom_call.1} parent=5 // pred_region
        %s536 = ssub.s32 %s17, 2
        // Predicated region
        $region45: #{tpu_custom_call.1} parent=43 // pred_check
          %p537 = pneg %p98
        $region46: #{tpu_custom_call.1} parent=43 // pred_check_branch
          %539 = sbr.rel (%p537) target = $region48
        $region47: #{tpu_custom_call.1} parent=43 // pred_region
          %s540 = sand.u32 %s83, 1
          %s541 = scalar_lea.sflag [#allocation6], %s540
          %s542 = sand.u32 %s83, 1
          %s543 = scalar_lea.vmem [#allocation9], %s542
          %545 = dma.done %s541, 16
        $region48: #{tpu_custom_call.1} parent=43 // pred_fallthru
          _
      $region44: #{tpu_custom_call.1} parent=5 // pred_fallthru
        _
    $region6: #{tpu_custom_call.1} parent=1 // loop_footer
      %s21 = sadd.s32 1, %s17
    $region7: #{tpu_custom_call.1} parent=1 // loop_footer_branch
      %16 = sbr.rel target = $region3
    $region8: #{tpu_custom_call.1} parent=1 // loop_exit
      _
    %546 = vsyncpa [#allocation5], 1
    %s547 = scalar_lea.sflag [#allocation5], 1
    %548 = vsyncpa %s547, 1
    %549 = vsyncpa [#allocation8], 1
    %s550 = scalar_lea.sflag [#allocation8], 1
    %551 = vsyncpa %s550, 1
    %552 = vsyncpa [#allocation6], 1
    %s553 = scalar_lea.sflag [#allocation6], 1
    %554 = vsyncpa %s553, 1

</llo_original>
